<compile_context>
chip_gen: v6e
topology: v6e:2x2x1
jax: 0.10.0
libtpu: 0.0.40
codegen_flags: <defaults>
</compile_context>

<pallas_src>
import functools

import jax
import jax.numpy as jnp
import numpy as np
from jax import lax
from jax.experimental import pallas as pl
from jax.experimental.pallas import tpu as pltpu

D_IN, D_H1, D_H2, D_OUT = 13, 32, 64, 1
DROP_P = 0.5

# "NT" contraction: (M, K) x (N, K) -> (M, N)  (same pattern as q @ k^T).
_NT_DIMS = (((1,), (1,)), ((), ()))


def _round_up(n, m):
    return (n + m - 1) // m * m


def _make_kernel(training: bool, tile_b: int, use_hw_prng: bool):
    """Kernel factory.

    Layout: x tile is (tile_b, 13) batch-major as it lives in HBM; everything
    after the first matmul is feature-major ((32, TB) / (64, TB) / (1, TB)),
    so all big stores are lane-dense.
    """

    def _prng_keep_masks(seed_ref):
        # Hardware PRNG, reseeded per (seed, tile) -> deterministic and
        # independent of core assignment.  One draw feeds both masks via
        # independent bits of the same words.
        pltpu.prng_seed(seed_ref[0], pl.program_id(0))
        bits = pltpu.prng_random_bits((D_H2, tile_b))
        keep1 = (bits[:D_H1, :] & 2) != 0          # bit 1, rows 0..31
        keep2 = (bits & 1) != 0                    # bit 0, all 64 rows
        return keep1, keep2

    def _hash_keep_masks(seed_ref):
        # Fallback (non-TPU backend / interpret mode): counter-based hash.
        # Single (64, TB) draw; scalar base hoisted off the vector path.
        seed_u32 = seed_ref[0].astype(jnp.uint32)
        tile_u32 = pl.program_id(0).astype(jnp.uint32)
        base = (seed_u32 * jnp.uint32(0x9E3779B9)
                + tile_u32 * jnp.uint32(tile_b) * jnp.uint32(0x27D4EB2F))
        rows = lax.broadcasted_iota(jnp.int32, (D_H2, tile_b), 0).astype(jnp.uint32)
        cols = lax.broadcasted_iota(jnp.int32, (D_H2, tile_b), 1).astype(jnp.uint32)
        v = base + cols * jnp.uint32(0x27D4EB2F) + rows * jnp.uint32(0x165667B1)
        v = v ^ (v >> 16)
        v = v * jnp.uint32(0x7FEB352D)
        v = v ^ (v >> 15)
        v = v * jnp.uint32(0x846CA68B)
        v = v ^ (v >> 16)
        keep1 = ((v[:D_H1, :] >> 30) & jnp.uint32(1)) != 0   # bit 30
        keep2 = (v >> 31) != 0                               # bit 31
        return keep1, keep2

    def kernel(seed_ref, x_ref, w1_ref, b1_ref, w2_ref, b2_ref, w3_ref, b3_ref,
               o_ref):
        # layer 1 ("NT"): (32,13) x (TB,13) -> (32,TB); x stays in its natural
        # batch-major layout, no wrapper or in-kernel transpose needed.
        h = lax.dot_general(w1_ref[...], x_ref[...], _NT_DIMS,
                            preferred_element_type=jnp.float32)
        h = jnp.maximum(h + b1_ref[...], 0.0)                  # (32, TB)

        if training:
            keep1, keep2 = (_prng_keep_masks(seed_ref) if use_hw_prng
                            else _hash_keep_masks(seed_ref))
            # 2x scale is folded into w2/w3 at prep time -> pure select here.
            h = jnp.where(keep1, h, 0.0)

        # layer 2: (64,32) @ (32,TB) + (64,1), ReLU
        h = jnp.dot(w2_ref[...], h, preferred_element_type=jnp.float32)
        h = jnp.maximum(h + b2_ref[...], 0.0)                  # (64, TB)

        if training:
            h = jnp.where(keep2, h, 0.0)

        # output layer: (1,64) @ (64,TB) + (1,1) -> lane-dense (1, TB) store.
        o = jnp.dot(w3_ref[...], h, preferred_element_type=jnp.float32)
        o_ref[...] = (o + b3_ref[...]).astype(o_ref.dtype)

    return kernel


@functools.partial(jax.jit, static_argnames=("training", "tile_b"))
def model_maker_forward(x, params, seed, *, training=False, tile_b=8192):
    """x: (B, 13) float32.  params: kernel-layout params (see prepare_params).
    Returns (B, 1) float32."""
    w1, b1, w2, b2, w3, b3 = params
    B = x.shape[0]
    assert x.shape[1] == D_IN

    # --- tile selection ---------------------------------------------------
    tile_b = _round_up(int(tile_b), 128)
    b128 = _round_up(B, 128)
    tb = min(tile_b, b128)
    # v7x megacore: keep >= 2 tiles on the "parallel" axis when batch allows,
    # so both TensorCores get work.
    if b128 >= 2 * 128 and pl.cdiv(b128, tb) < 2:
        tb = _round_up(pl.cdiv(b128, 2), 128)
    n_tiles = pl.cdiv(B, tb)

    seed_arr = jnp.asarray(seed, dtype=jnp.int32).reshape((1,))
    use_hw_prng = jax.default_backend() == "tpu"
    kernel = _make_kernel(training, tb, use_hw_prng)

    const = lambda i, s: (0, 0)        # weights/biases: VMEM-resident, DMA'd once
    grid_spec = pltpu.PrefetchScalarGridSpec(
        num_scalar_prefetch=1,         # seed lands in SMEM
        grid=(n_tiles,),
        in_specs=[
            pl.BlockSpec((tb, D_IN), lambda i, s: (i, 0)),     # x tile (natural layout)
            pl.BlockSpec((D_H1, D_IN), const),                 # w1 (32,13)
            pl.BlockSpec((D_H1, 1), const),                    # b1 (32,1)
            pl.BlockSpec((D_H2, D_H1), const),                 # w2 (64,32)
            pl.BlockSpec((D_H2, 1), const),                    # b2 (64,1)
            pl.BlockSpec((D_OUT, D_H2), const),                # w3 (1,64)
            pl.BlockSpec((D_OUT, 1), const),                   # b3 (1,1)
        ],
        out_specs=pl.BlockSpec((D_OUT, tb), lambda i, s: (0, i)),
    )

    out = pl.pallas_call(
        kernel,
        out_shape=jax.ShapeDtypeStruct((D_OUT, B), jnp.float32),
        grid_spec=grid_spec,
        compiler_params=pltpu.CompilerParams(
            dimension_semantics=("parallel",),                 # megacore sharding
            vmem_limit_bytes=32 * 1024 * 1024),                # v5e default is 16 MiB
    )(seed_arr, x, w1, b1, w2, b2, w3, b3)

    # (1, B) -> (B, 1): pure reshape of contiguous data, no HBM repack.
    return out.reshape(B, D_OUT)


def init_params(key):
    """PyTorch-layout params: weight (out, in), bias (out,), U(-1/sqrt(in), ...)."""
    ks = jax.random.split(key, 6)

    def linear(kw, kb, d_in, d_out):
        bound = 1.0 / np.sqrt(d_in)
        w = jax.random.uniform(kw, (d_out, d_in), jnp.float32, -bound, bound)
        b = jax.random.uniform(kb, (d_out,), jnp.float32, -bound, bound)
        return w, b

    w1, b1 = linear(ks[0], ks[1], D_IN, D_H1)
    w2, b2 = linear(ks[2], ks[3], D_H1, D_H2)
    w3, b3 = linear(ks[4], ks[5], D_H2, D_OUT)
    return (w1, b1, w2, b2, w3, b3)


def prepare_params(params, training):
    """One-time prep: reshape biases for broadcast and, in training mode, fold
    the dropout 1/(1-p)=2 scale into the *next* layer's weights (w2, w3).

    WARNING: params prepped with training=True are only valid for
    model_maker_forward(..., training=True); feeding them to an eval-mode call
    silently scales the output (up to 4x).  Keep the two prepped sets separate.
    """
    w1, b1, w2, b2, w3, b3 = params
    s = jnp.float32(1.0 / (1.0 - DROP_P)) if training else jnp.float32(1.0)
    return (w1, b1.reshape(D_H1, 1),
            w2 * s, b2.reshape(D_H2, 1),
            w3 * s, b3.reshape(D_OUT, 1))


def reference_eval(x, params):
    """Pure-numpy f32 reference of the eval-mode forward (dropout = identity)."""
    w1, b1, w2, b2, w3, b3 = params   # torch layout
    h = np.maximum(x @ w1.T + b1, 0.0)
    h = np.maximum(h @ w2.T + b2, 0.0)
    return h @ w3.T + b3


if __name__ == "__main__":
    key = jax.random.PRNGKey(0)
    k_param, k_x = jax.random.split(key)

    params = init_params(k_param)
    B = 300                    # non-multiple of 128 -> exercises clipped edge tile
    x = jax.random.normal(k_x, (B, D_IN), dtype=jnp.float32)

    # Eval mode (dropout = identity): must match the numpy reference.
    eval_params = prepare_params(params, training=False)
    y_eval = model_maker_forward(x, eval_params, 0, training=False)
    jax.block_until_ready(y_eval)
    assert y_eval.shape == (B, D_OUT)
    y_ref = reference_eval(np.asarray(x), tuple(np.asarray(p) for p in params))
    np.testing.assert_allclose(np.asarray(y_eval), y_ref, rtol=1e-2, atol=1e-2)

    # Train mode: Bernoulli(0.5) dropout from the HW PRNG, deterministic per seed.
    train_params = prepare_params(params, training=True)
    y_t1 = model_maker_forward(x, train_params, 123, training=True)
    y_t2 = model_maker_forward(x, train_params, 123, training=True)
    jax.block_until_ready((y_t1, y_t2))
    assert y_t1.shape == (B, D_OUT)
    assert bool(jnp.all(jnp.isfinite(y_t1)))
    np.testing.assert_array_equal(np.asarray(y_t1), np.asarray(y_t2))

    print("KERNEL_OK")
</pallas_src>

<mosaic_0001>
module attributes {stable_mosaic.version = 11 : i64} {
  func.func @kernel(%arg0: i32, %arg1: memref<1xi32, #tpu.memory_space<smem>>, %arg2: memref<256x13xf32, #tpu.memory_space<vmem>>, %arg3: memref<32x13xf32, #tpu.memory_space<vmem>>, %arg4: memref<32x1xf32, #tpu.memory_space<vmem>>, %arg5: memref<64x32xf32, #tpu.memory_space<vmem>>, %arg6: memref<64x1xf32, #tpu.memory_space<vmem>>, %arg7: memref<1x64xf32, #tpu.memory_space<vmem>>, %arg8: memref<1x1xf32, #tpu.memory_space<vmem>>, %arg9: memref<1x256xf32, #tpu.memory_space<vmem>>) attributes {dimension_semantics = [#tpu.dimension_semantics<parallel>], iteration_bounds = array<i64: 2>, scalar_prefetch = 1 : i64, scratch_operands = 0 : i64, tpu.core_type = #tpu.core_type<tc>, window_params = [{transform_indices = @transform_0, window_bounds = array<i64: 256, 13>}, {pipeline_mode = #tpu.pipeline_mode<synchronous>, transform_indices = @transform_1, window_bounds = array<i64: 32, 13>}, {pipeline_mode = #tpu.pipeline_mode<synchronous>, transform_indices = @transform_2, window_bounds = array<i64: 32, 1>}, {pipeline_mode = #tpu.pipeline_mode<synchronous>, transform_indices = @transform_3, window_bounds = array<i64: 64, 32>}, {pipeline_mode = #tpu.pipeline_mode<synchronous>, transform_indices = @transform_4, window_bounds = array<i64: 64, 1>}, {pipeline_mode = #tpu.pipeline_mode<synchronous>, transform_indices = @transform_5, window_bounds = array<i64: 1, 64>}, {pipeline_mode = #tpu.pipeline_mode<synchronous>, transform_indices = @transform_6, window_bounds = array<i64: 1, 1>}, {transform_indices = @transform_7, window_bounds = array<i64: 1, 256>}]} {
    %c0 = arith.constant 0 : index
    %c0_0 = arith.constant 0 : index
    %0 = vector.load %arg3[%c0, %c0_0] : memref<32x13xf32, #tpu.memory_space<vmem>>, vector<32x13xf32>
    %c0_1 = arith.constant 0 : index
    %c0_2 = arith.constant 0 : index
    %1 = vector.load %arg2[%c0_1, %c0_2] : memref<256x13xf32, #tpu.memory_space<vmem>>, vector<256x13xf32>
    %cst = arith.constant dense<0.000000e+00> : vector<32x256xf32>
    %2 = tpu.matmul %0, %1, %cst {dimension_numbers = #tpu.dot_dimension_numbers<[1], [1], [0], [0], [0, 0, 1, 0], [], []>} : vector<32x13xf32>, vector<256x13xf32>, vector<32x256xf32> -> vector<32x256xf32>
    %c0_3 = arith.constant 0 : index
    %c0_4 = arith.constant 0 : index
    %3 = vector.load %arg4[%c0_3, %c0_4] : memref<32x1xf32, #tpu.memory_space<vmem>>, vector<32x1xf32>
    %4 = vector.broadcast %3 : vector<32x1xf32> to vector<32x256xf32>
    %5 = arith.addf %2, %4 : vector<32x256xf32>
    %cst_5 = arith.constant 0.000000e+00 : f32
    %6 = vector.broadcast %cst_5 : f32 to vector<32x256xf32>
    %7 = arith.maximumf %5, %6 : vector<32x256xf32>
    %c0_6 = arith.constant 0 : index
    %c0_7 = arith.constant 0 : index
    %8 = vector.load %arg5[%c0_6, %c0_7] : memref<64x32xf32, #tpu.memory_space<vmem>>, vector<64x32xf32>
    %cst_8 = arith.constant dense<0.000000e+00> : vector<64x256xf32>
    %9 = tpu.matmul %8, %7, %cst_8 {dimension_numbers = #tpu.dot_dimension_numbers<[1], [0], [0], [1], [0, 0, 1, 1], [], []>} : vector<64x32xf32>, vector<32x256xf32>, vector<64x256xf32> -> vector<64x256xf32>
    %c0_9 = arith.constant 0 : index
    %c0_10 = arith.constant 0 : index
    %10 = vector.load %arg6[%c0_9, %c0_10] : memref<64x1xf32, #tpu.memory_space<vmem>>, vector<64x1xf32>
    %11 = vector.broadcast %10 : vector<64x1xf32> to vector<64x256xf32>
    %12 = arith.addf %9, %11 : vector<64x256xf32>
    %cst_11 = arith.constant 0.000000e+00 : f32
    %13 = vector.broadcast %cst_11 : f32 to vector<64x256xf32>
    %14 = arith.maximumf %12, %13 : vector<64x256xf32>
    %c0_12 = arith.constant 0 : index
    %c0_13 = arith.constant 0 : index
    %15 = vector.load %arg7[%c0_12, %c0_13] : memref<1x64xf32, #tpu.memory_space<vmem>>, vector<1x64xf32>
    %cst_14 = arith.constant dense<0.000000e+00> : vector<1x256xf32>
    %16 = tpu.matmul %15, %14, %cst_14 {dimension_numbers = #tpu.dot_dimension_numbers<[1], [0], [0], [1], [0, 0, 1, 1], [], []>} : vector<1x64xf32>, vector<64x256xf32>, vector<1x256xf32> -> vector<1x256xf32>
    %c0_15 = arith.constant 0 : index
    %c0_16 = arith.constant 0 : index
    %17 = vector.load %arg8[%c0_15, %c0_16] : memref<1x1xf32, #tpu.memory_space<vmem>>, vector<1x1xf32>
    %18 = vector.broadcast %17 : vector<1x1xf32> to vector<1x256xf32>
    %19 = arith.addf %16, %18 : vector<1x256xf32>
    %c0_17 = arith.constant 0 : index
    %c0_18 = arith.constant 0 : index
    %20 = vector.load %arg9[%c0_17, %c0_18] : memref<1x256xf32, #tpu.memory_space<vmem>>, vector<1x256xf32>
    tpu.vector_store %arg9[%c0_17, %c0_18], %19 {strides = array<i32>} : memref<1x256xf32, #tpu.memory_space<vmem>>, vector<1x256xf32>,
    return
  }
  func.func @transform_0(%arg0: i32, %arg1: memref<1xi32, #tpu.memory_space<smem>>) -> (i32, i32) {
    %c0_i32 = arith.constant 0 : i32
    %c0_i32_0 = arith.constant 0 : i32
    return %arg0, %c0_i32 : i32, i32
  }
  func.func @transform_1(%arg0: i32, %arg1: memref<1xi32, #tpu.memory_space<smem>>) -> (i32, i32) {
    %c0_i32 = arith.constant 0 : i32
    %c0_i32_0 = arith.constant 0 : i32
    %c0_i32_1 = arith.constant 0 : i32
    return %c0_i32, %c0_i32_0 : i32, i32
  }
  func.func @transform_2(%arg0: i32, %arg1: memref<1xi32, #tpu.memory_space<smem>>) -> (i32, i32) {
    %c0_i32 = arith.constant 0 : i32
    %c0_i32_0 = arith.constant 0 : i32
    %c0_i32_1 = arith.constant 0 : i32
    return %c0_i32, %c0_i32_0 : i32, i32
  }
  func.func @transform_3(%arg0: i32, %arg1: memref<1xi32, #tpu.memory_space<smem>>) -> (i32, i32) {
    %c0_i32 = arith.constant 0 : i32
    %c0_i32_0 = arith.constant 0 : i32
    %c0_i32_1 = arith.constant 0 : i32
    return %c0_i32, %c0_i32_0 : i32, i32
  }
  func.func @transform_4(%arg0: i32, %arg1: memref<1xi32, #tpu.memory_space<smem>>) -> (i32, i32) {
    %c0_i32 = arith.constant 0 : i32
    %c0_i32_0 = arith.constant 0 : i32
    %c0_i32_1 = arith.constant 0 : i32
    return %c0_i32, %c0_i32_0 : i32, i32
  }
  func.func @transform_5(%arg0: i32, %arg1: memref<1xi32, #tpu.memory_space<smem>>) -> (i32, i32) {
    %c0_i32 = arith.constant 0 : i32
    %c0_i32_0 = arith.constant 0 : i32
    %c0_i32_1 = arith.constant 0 : i32
    return %c0_i32, %c0_i32_0 : i32, i32
  }
  func.func @transform_6(%arg0: i32, %arg1: memref<1xi32, #tpu.memory_space<smem>>) -> (i32, i32) {
    %c0_i32 = arith.constant 0 : i32
    %c0_i32_0 = arith.constant 0 : i32
    %c0_i32_1 = arith.constant 0 : i32
    return %c0_i32, %c0_i32_0 : i32, i32
  }
  func.func @transform_7(%arg0: i32, %arg1: memref<1xi32, #tpu.memory_space<smem>>) -> (i32, i32) {
    %c0_i32 = arith.constant 0 : i32
    %c0_i32_0 = arith.constant 0 : i32
    return %c0_i32, %arg0 : i32, i32
  }
}

</mosaic_0001>

<llo_original>
// kernel: model_maker_forward.1
$region0: #{model_maker_forward.1}
  #allocation0 [shape = 'u32[]', space=smem, size = 0x4, offset = 0x4, fixed_abs, tag = 'smem constant byte address 0x4 - core index']
  #allocation1 [shape = 'u32[144,128]{1,0:T(1,128)}', space=vmem, size = 0x12000, scoped, tag = 'internal scratch']
  #allocation2 [shape = 's32[1]{0}', space=sflag, size = 0x4, scoped, tag = 'scoped memory for model_maker_forward.1']
  #allocation3 [shape = 's32[1]{0:T(128)S(6)}', space=smem, size = 0x200, scoped, tag = 'prefetched SMEM operand 0']
  #allocation4 [shape = 'f32[1,1]{1,0:T(1,128)S(1)}', space=vmem, size = 0x200, scoped, tag = 'scoped memory for model_maker_forward.1']
  %s0 = inlined_call_operand.<no memory space> [shape: s32[1], index: 0, kind: input, shape index: {}]
  %s1 = inlined_call_operand.vmem [shape: f32[300,13], index: 1, kind: input, shape index: {}]
  %s2 = inlined_call_operand.vmem [shape: f32[32,13], index: 2, kind: input, shape index: {}]
  %s3 = inlined_call_operand.vmem [shape: f32[32,1], index: 3, kind: input, shape index: {}]
  %s4 = inlined_call_operand.vmem [shape: f32[64,32], index: 4, kind: input, shape index: {}]
  %s5 = inlined_call_operand.vmem [shape: f32[64,1], index: 5, kind: input, shape index: {}]
  %s6 = inlined_call_operand.vmem [shape: f32[1,64], index: 6, kind: input, shape index: {}]
  %s7 = inlined_call_operand.<no memory space> [shape: f32[1,1], index: 7, kind: input, shape index: {}]
  %s8 = inlined_call_operand.hbm [shape: f32[1,300], index: 8, kind: output, shape index: {}]
  %s9 = sld [smem:[#allocation0]]
  $region61: #{model_maker_forward.1} parent=0
    _
  %s11 = ssub.s32 1, %s9
  %s12 = scalar_select 0, %s11, %s9
  %13 = sst [smem:[#allocation3]] %s0
  %v14 = vstv %s7
  %15 = vst [vmem:[#allocation4] sm:$0x1] %v14
  $region1: #{model_maker_forward.1} parent=0
    #allocation5 [shape = 'u8[2048]{0}', space=vmem, size = 0x800, scoped, tag = 'output window, operand 0']
    #allocation6 [shape = 's32[2]{0}', space=sflag, size = 0x8, scoped, tag = 'scoped memory for model_maker_forward.1']
    %16 = vsyncpa [#allocation6], 0
    %s17 = scalar_lea.sflag [#allocation6], 1
    %18 = vsyncpa %s17, 0
    loop: start=0, step=1, limit=4
    $region2: #{model_maker_forward.1} parent=1 // loop_pre_header
      _
    $region3: #{model_maker_forward.1} parent=1 // loop_header
      %s20 = sphi 0, %s24
      %p21 = scmp.ge.s32.totalorder %s20, 4
      %s30 = sphi 0, %s32
      %s33 = sphi 0, %s30
      %s34 = sphi 0, %s33
      %s50 = sphi 0, %s34
      %s54 = sphi 0, %s54
      %s56 = sphi 0, %s54
      %s57 = sphi 0, %s56
      %s71 = sphi 0, %s57
      %s75 = sphi 0, %s75
      %s77 = sphi 0, %s75
      %s78 = sphi 0, %s77
      %s92 = sphi 0, %s78
      %s96 = sphi 0, %s96
      %s98 = sphi 0, %s96
      %s99 = sphi 0, %s98
      %s113 = sphi 0, %s99
      %s117 = sphi 0, %s117
      %s119 = sphi 0, %s117
      %s120 = sphi 0, %s119
      %s134 = sphi 0, %s120
      %s138 = sphi 0, %s138
      %s140 = sphi 0, %s138
      %s141 = sphi 0, %s140
      %s155 = sphi 0, %s141
      %s159 = sphi 0, %s159
      %s161 = sphi 0, %s159
      %s162 = sphi 0, %s161
      %s176 = sphi 0, %s162
      %s182 = sphi 0, %s184
      %s185 = sphi 0, %s182
      %s186 = sphi 0, %s185
      %s202 = sphi 0, %s186
    $region4: #{model_maker_forward.1} parent=1 // loop_header_branch
      %23 = sbr.rel (%p21) target = $region8
    $region5: #{model_maker_forward.1} parent=1 // loop_body
      %s25 = ssub.s32 %s20, 1
      %s26 = ssub.s32 %s20, 2
      %s27 = sadd.s32 %s20, 1
      %s28 = ssub.s32 %s20, %s27
      %p29 = scmp.eq.s32.totalorder %s28, 0
      %s31 = sadd.s32 %s30, 1
      %s32 = scalar_select %p29, %s30, %s31
      %p35 = pneg %p29
      %p36 = scmp.eq.s32.totalorder %s20, 1
      %p37 = por %p35, %p36
      %p38 = scmp.ne.s32.totalorder %s30, %s33
      %p39 = scmp.eq.s32.totalorder %s20, 0
      %p40 = por %p38, %p39
      %p41 = scmp.ne.s32.totalorder %s30, %s33
      %p42 = scmp.eq.s32.totalorder %s25, 1
      %p43 = por %p41, %p42
      %p44 = scmp.ne.s32.totalorder %s33, %s34
      %p45 = scmp.eq.s32.totalorder %s25, 0
      %p46 = por %p44, %p45
      %p47 = scmp.ne.s32.totalorder %s33, %s34
      %p48 = scmp.eq.s32.totalorder %s26, 1
      %p49 = por %p47, %p48
      %p51 = scmp.ne.s32.totalorder %s34, %s50
      %p52 = scmp.eq.s32.totalorder %s26, 0
      %p53 = por %p51, %p52
      %s55 = sadd.s32 %s54, 1
      %p58 = scmp.eq.s32.totalorder %s20, 1
      %p59 = scmp.ne.s32.totalorder %s54, %s56
      %p60 = scmp.eq.s32.totalorder %s20, 0
      %p61 = por %p59, %p60
      %p62 = scmp.ne.s32.totalorder %s54, %s56
      %p63 = scmp.eq.s32.totalorder %s25, 1
      %p64 = por %p62, %p63
      %p65 = scmp.ne.s32.totalorder %s56, %s57
      %p66 = scmp.eq.s32.totalorder %s25, 0
      %p67 = por %p65, %p66
      %p68 = scmp.ne.s32.totalorder %s56, %s57
      %p69 = scmp.eq.s32.totalorder %s26, 1
      %p70 = por %p68, %p69
      %p72 = scmp.ne.s32.totalorder %s57, %s71
      %p73 = scmp.eq.s32.totalorder %s26, 0
      %p74 = por %p72, %p73
      %s76 = sadd.s32 %s75, 1
      %p79 = scmp.eq.s32.totalorder %s20, 1
      %p80 = scmp.ne.s32.totalorder %s75, %s77
      %p81 = scmp.eq.s32.totalorder %s20, 0
      %p82 = por %p80, %p81
      %p83 = scmp.ne.s32.totalorder %s75, %s77
      %p84 = scmp.eq.s32.totalorder %s25, 1
      %p85 = por %p83, %p84
      %p86 = scmp.ne.s32.totalorder %s77, %s78
      %p87 = scmp.eq.s32.totalorder %s25, 0
      %p88 = por %p86, %p87
      %p89 = scmp.ne.s32.totalorder %s77, %s78
      %p90 = scmp.eq.s32.totalorder %s26, 1
      %p91 = por %p89, %p90
      %p93 = scmp.ne.s32.totalorder %s78, %s92
      %p94 = scmp.eq.s32.totalorder %s26, 0
      %p95 = por %p93, %p94
      %s97 = sadd.s32 %s96, 1
      %p100 = scmp.eq.s32.totalorder %s20, 1
      %p101 = scmp.ne.s32.totalorder %s96, %s98
      %p102 = scmp.eq.s32.totalorder %s20, 0
      %p103 = por %p101, %p102
      %p104 = scmp.ne.s32.totalorder %s96, %s98
      %p105 = scmp.eq.s32.totalorder %s25, 1
      %p106 = por %p104, %p105
      %p107 = scmp.ne.s32.totalorder %s98, %s99
      %p108 = scmp.eq.s32.totalorder %s25, 0
      %p109 = por %p107, %p108
      %p110 = scmp.ne.s32.totalorder %s98, %s99
      %p111 = scmp.eq.s32.totalorder %s26, 1
      %p112 = por %p110, %p111
      %p114 = scmp.ne.s32.totalorder %s99, %s113
      %p115 = scmp.eq.s32.totalorder %s26, 0
      %p116 = por %p114, %p115
      %s118 = sadd.s32 %s117, 1
      %p121 = scmp.eq.s32.totalorder %s20, 1
      %p122 = scmp.ne.s32.totalorder %s117, %s119
      %p123 = scmp.eq.s32.totalorder %s20, 0
      %p124 = por %p122, %p123
      %p125 = scmp.ne.s32.totalorder %s117, %s119
      %p126 = scmp.eq.s32.totalorder %s25, 1
      %p127 = por %p125, %p126
      %p128 = scmp.ne.s32.totalorder %s119, %s120
      %p129 = scmp.eq.s32.totalorder %s25, 0
      %p130 = por %p128, %p129
      %p131 = scmp.ne.s32.totalorder %s119, %s120
      %p132 = scmp.eq.s32.totalorder %s26, 1
      %p133 = por %p131, %p132
      %p135 = scmp.ne.s32.totalorder %s120, %s134
      %p136 = scmp.eq.s32.totalorder %s26, 0
      %p137 = por %p135, %p136
      %s139 = sadd.s32 %s138, 1
      %p142 = scmp.eq.s32.totalorder %s20, 1
      %p143 = scmp.ne.s32.totalorder %s138, %s140
      %p144 = scmp.eq.s32.totalorder %s20, 0
      %p145 = por %p143, %p144
      %p146 = scmp.ne.s32.totalorder %s138, %s140
      %p147 = scmp.eq.s32.totalorder %s25, 1
      %p148 = por %p146, %p147
      %p149 = scmp.ne.s32.totalorder %s140, %s141
      %p150 = scmp.eq.s32.totalorder %s25, 0
      %p151 = por %p149, %p150
      %p152 = scmp.ne.s32.totalorder %s140, %s141
      %p153 = scmp.eq.s32.totalorder %s26, 1
      %p154 = por %p152, %p153
      %p156 = scmp.ne.s32.totalorder %s141, %s155
      %p157 = scmp.eq.s32.totalorder %s26, 0
      %p158 = por %p156, %p157
      %s160 = sadd.s32 %s159, 1
      %p163 = scmp.eq.s32.totalorder %s20, 1
      %p164 = scmp.ne.s32.totalorder %s159, %s161
      %p165 = scmp.eq.s32.totalorder %s20, 0
      %p166 = por %p164, %p165
      %p167 = scmp.ne.s32.totalorder %s159, %s161
      %p168 = scmp.eq.s32.totalorder %s25, 1
      %p169 = por %p167, %p168
      %p170 = scmp.ne.s32.totalorder %s161, %s162
      %p171 = scmp.eq.s32.totalorder %s25, 0
      %p172 = por %p170, %p171
      %p173 = scmp.ne.s32.totalorder %s161, %s162
      %p174 = scmp.eq.s32.totalorder %s26, 1
      %p175 = por %p173, %p174
      %p177 = scmp.ne.s32.totalorder %s162, %s176
      %p178 = scmp.eq.s32.totalorder %s26, 0
      %p179 = por %p177, %p178
      %s180 = ssub.s32 %s20, %s27
      %p181 = scmp.eq.s32.totalorder %s180, 0
      %s183 = sadd.s32 %s182, 1
      %s184 = scalar_select %p181, %s182, %s183
      %p187 = pneg %p181
      %p188 = scmp.eq.s32.totalorder %s20, 1
      %p189 = por %p187, %p188
      %p190 = scmp.ne.s32.totalorder %s182, %s185
      %p191 = scmp.eq.s32.totalorder %s20, 0
      %p192 = por %p190, %p191
      %p193 = scmp.ne.s32.totalorder %s182, %s185
      %p194 = scmp.eq.s32.totalorder %s25, 1
      %p195 = por %p193, %p194
      %p196 = scmp.ne.s32.totalorder %s185, %s186
      %p197 = scmp.eq.s32.totalorder %s25, 0
      %p198 = por %p196, %p197
      %p199 = scmp.ne.s32.totalorder %s185, %s186
      %p200 = scmp.eq.s32.totalorder %s26, 1
      %p201 = por %p199, %p200
      %p203 = scmp.ne.s32.totalorder %s186, %s202
      %p204 = scmp.eq.s32.totalorder %s26, 0
      %p205 = por %p203, %p204
      %p206 = scmp.le.s32.totalorder 1, %s20
      %p207 = scmp.lt.s32.totalorder %s20, 3
      %p208 = pnand %p206, %p207
      %p209 = pneg %p208
      // Predicated region
      $region9: #{model_maker_forward.1} parent=5 // pred_check
        _
      $region10: #{model_maker_forward.1} parent=5 // pred_check_branch
        %211 = sbr.rel (%p208) target = $region12
      $region11: #{model_maker_forward.1} parent=5 // pred_region
        %s212 = ssub.s32 %s20, 1
        // Predicated region
        $region13: #{model_maker_forward.1} parent=11 // pred_check
          %p213 = pneg %p67
        $region14: #{model_maker_forward.1} parent=11 // pred_check_branch
          %215 = sbr.rel (%p213) target = $region16
        $region15: #{model_maker_forward.1} parent=11 // pred_region
          _
        $region16: #{model_maker_forward.1} parent=11 // pred_fallthru
          _
        // Predicated region
        $region17: #{model_maker_forward.1} parent=11 // pred_check
          %p216 = pneg %p88
        $region18: #{model_maker_forward.1} parent=11 // pred_check_branch
          %218 = sbr.rel (%p216) target = $region20
        $region19: #{model_maker_forward.1} parent=11 // pred_region
          _
        $region20: #{model_maker_forward.1} parent=11 // pred_fallthru
          _
        // Predicated region
        $region21: #{model_maker_forward.1} parent=11 // pred_check
          %p219 = pneg %p109
        $region22: #{model_maker_forward.1} parent=11 // pred_check_branch
          %221 = sbr.rel (%p219) target = $region24
        $region23: #{model_maker_forward.1} parent=11 // pred_region
          _
        $region24: #{model_maker_forward.1} parent=11 // pred_fallthru
          _
        // Predicated region
        $region25: #{model_maker_forward.1} parent=11 // pred_check
          %p222 = pneg %p130
        $region26: #{model_maker_forward.1} parent=11 // pred_check_branch
          %224 = sbr.rel (%p222) target = $region28
        $region27: #{model_maker_forward.1} parent=11 // pred_region
          _
        $region28: #{model_maker_forward.1} parent=11 // pred_fallthru
          _
        // Predicated region
        $region29: #{model_maker_forward.1} parent=11 // pred_check
          %p225 = pneg %p151
        $region30: #{model_maker_forward.1} parent=11 // pred_check_branch
          %227 = sbr.rel (%p225) target = $region32
        $region31: #{model_maker_forward.1} parent=11 // pred_region
          _
        $region32: #{model_maker_forward.1} parent=11 // pred_fallthru
          _
        // Predicated region
        $region33: #{model_maker_forward.1} parent=11 // pred_check
          %p228 = pneg %p172
        $region34: #{model_maker_forward.1} parent=11 // pred_check_branch
          %230 = sbr.rel (%p228) target = $region36
        $region35: #{model_maker_forward.1} parent=11 // pred_region
          _
        $region36: #{model_maker_forward.1} parent=11 // pred_fallthru
          _
      $region12: #{model_maker_forward.1} parent=5 // pred_fallthru
        _
      %p231 = scmp.lt.s32.totalorder %s20, 2
      // Predicated region
      $region37: #{model_maker_forward.1} parent=5 // pred_check
        %p232 = pneg %p231
      $region38: #{model_maker_forward.1} parent=5 // pred_check_branch
        %234 = sbr.rel (%p232) target = $region40
      $region39: #{model_maker_forward.1} parent=5 // pred_region
        // Predicated region
        $region41: #{model_maker_forward.1} parent=39 // pred_check
          %p235 = pneg %p40
        $region42: #{model_maker_forward.1} parent=39 // pred_check_branch
          %237 = sbr.rel (%p235) target = $region44
        $region43: #{model_maker_forward.1} parent=39 // pred_region
          %s238 = smul.u32 32, %s20
          %s239 = ssub.s32 38, %s238
          %p240 = scmp.lt.s32.totalorder %s239, 32
          %s241 = scalar_select %p240, %s239, 32
          %s242 = smul.u32 128, %s241
          %p243 = scmp.lt.s32.totalorder %s238, 37
          %s244 = scalar_select %p243, %s238, 37
          %s245 = smul.addr %s244, 8
          %s246 = scalar_lea.vmem %s1, %s245
          %s247 = smul.u32 32, %s20
          %s248 = ssub.s32 38, %s247
          %p249 = scmp.lt.s32.totalorder %s248, 32
          %s250 = scalar_select %p249, %s248, 32
          %s251 = smul.u32 128, %s250
        $region44: #{model_maker_forward.1} parent=39 // pred_fallthru
          _
      $region40: #{model_maker_forward.1} parent=5 // pred_fallthru
        _
      %p252 = scmp.le.s32.totalorder 1, %s20
      %p253 = scmp.lt.s32.totalorder %s20, 3
      %p254 = pnand %p252, %p253
      %p255 = pneg %p254
      // Predicated region
      $region45: #{model_maker_forward.1} parent=5 // pred_check
        _
      $region46: #{model_maker_forward.1} parent=5 // pred_check_branch
        %257 = sbr.rel (%p254) target = $region48
      $region47: #{model_maker_forward.1} parent=5 // pred_region
        %s258 = ssub.s32 %s20, 1
        %s259 = smul.u32 32, %s25
        %s260 = ssub.s32 38, %s259
        %p261 = scmp.lt.s32.totalorder %s260, 32
        %s262 = scalar_select %p261, %s260, 32
        %s263 = smul.u32 128, %s262
        %p264 = scmp.lt.s32.totalorder %s259, 37
        %s265 = scalar_select %p264, %s259, 37
        %s266 = smul.addr %s265, 8
        %s267 = scalar_lea.vmem %s1, %s266
        %p268 = pneg %p46
        %p269 = pneg %p43
        %p270 = pneg %p67
        %p271 = pneg %p64
        %p272 = pneg %p88
        %p273 = pneg %p85
        %p274 = pneg %p109
        %p275 = pneg %p106
        %p276 = pneg %p130
        %p277 = pneg %p127
        %p278 = pneg %p151
        %p279 = pneg %p148
        %p280 = pneg %p172
        %p281 = pneg %p169
        %p282 = pneg %p198
        %p283 = pneg %p195
        %s284 = sand.u32 %s185, 1
        %s285 = scalar_lea.sflag [#allocation6], %s284
        %s286 = sand.u32 %s185, 1
        %s287 = smul.addr %s286, 2
        %s288 = scalar_lea.vmem [#allocation5], %s287
        %s289 = smul.u32 32, %s25
        %s290 = ssub.s32 38, %s289
        %p291 = scmp.lt.s32.totalorder %s290, 32
        %s292 = scalar_select %p291, %s290, 32
        %s293 = smul.u32 128, %s292
        %p294 = scmp.lt.s32.totalorder %s289, 37
        %s295 = scalar_select %p294, %s289, 37
        %s296 = smul.addr %s295, 8
        %s297 = scalar_lea.vmem %s1, %s296
        %s298 = smul.u32 32, %s25
        %s299 = ssub.s32 38, %s298
        %p300 = scmp.lt.s32.totalorder %s299, 32
        %s301 = scalar_select %p300, %s299, 32
        %s302 = smul.u32 128, %s301
        %s303 = smul.u32 2, %s25
        %s304 = ssub.s32 3, %s303
        %p305 = scmp.lt.s32.totalorder %s304, 2
        %s306 = scalar_select %p305, %s304, 2
        %s307 = smul.u32 16, %s306
        %v308 = vld [vmem:[%s2] sm:$0xff]
        %v309 = vld [vmem:[%s2 + $0x8] sm:$0xff]
        %v310 = vld [vmem:[%s2 + $0x10] sm:$0xff]
        %v311 = vld [vmem:[%s2 + $0x18] sm:$0xff]
        %v312 = vld [vmem:[%s297] sm:$0xff]
        %v313 = vld [vmem:[%s297 + $0x8] sm:$0xff]
        %v314 = vld [vmem:[%s297 + $0x10] sm:$0xff]
        %v315 = vld [vmem:[%s297 + $0x18] sm:$0xff]
        %v316 = vld [vmem:[%s297 + $0x20] sm:$0xff]
        %v317 = vld [vmem:[%s297 + $0x28] sm:$0xff]
        %v318 = vld [vmem:[%s297 + $0x30] sm:$0xff]
        %v319 = vld [vmem:[%s297 + $0x38] sm:$0xff]
        %v320 = vld [vmem:[%s297 + $0x40] sm:$0xff]
        %v321 = vld [vmem:[%s297 + $0x48] sm:$0xff]
        %v322 = vld [vmem:[%s297 + $0x50] sm:$0xff]
        %v323 = vld [vmem:[%s297 + $0x58] sm:$0xff]
        %v324 = vld [vmem:[%s297 + $0x60] sm:$0xff]
        %v325 = vld [vmem:[%s297 + $0x68] sm:$0xff]
        %v326 = vld [vmem:[%s297 + $0x70] sm:$0xff]
        %v327 = vld [vmem:[%s297 + $0x78] sm:$0xff]
        %v328 = vld [vmem:[%s297 + $0x80] sm:$0xff]
        %v329 = vld [vmem:[%s297 + $0x88] sm:$0xff]
        %v330 = vld [vmem:[%s297 + $0x90] sm:$0xff]
        %v331 = vld [vmem:[%s297 + $0x98] sm:$0xff]
        %v332 = vld [vmem:[%s297 + $0xa0] sm:$0xff]
        %v333 = vld [vmem:[%s297 + $0xa8] sm:$0xff]
        %v334 = vld [vmem:[%s297 + $0xb0] sm:$0xff]
        %v335 = vld [vmem:[%s297 + $0xb8] sm:$0xff]
        %v336 = vld [vmem:[%s297 + $0xc0] sm:$0xff]
        %v337 = vld [vmem:[%s297 + $0xc8] sm:$0xff]
        %v338 = vld [vmem:[%s297 + $0xd0] sm:$0xff]
        %v339 = vld [vmem:[%s297 + $0xd8] sm:$0xff]
        %v340 = vld [vmem:[%s297 + $0xe0] sm:$0xff]
        %v341 = vld [vmem:[%s297 + $0xe8] sm:$0xff]
        %v342 = vld [vmem:[%s297 + $0xf0] sm:$0xff]
        %v343 = vld [vmem:[%s297 + $0xf8] sm:$0xff]
        %v344 = vld [vmem:[%s3] sm:$0xff]
        %v345 = vld [vmem:[%s3 + $0x8] sm:$0xff]
        %v346 = vld [vmem:[%s3 + $0x10] sm:$0xff]
        %v347 = vld [vmem:[%s3 + $0x18] sm:$0xff]
        %349 = vset.pattern.permute.xlu0 0
        %350 = vperm.xlu0 %349, %v344
        %v351 = vpop.permute.xlu0 %350
        %354 = vset.pattern.permute.xlu0 0
        %355 = vperm.xlu0 %354, %v345
        %v356 = vpop.permute.xlu0 %355
        %359 = vset.pattern.permute.xlu0 0
        %360 = vperm.xlu0 %359, %v346
        %v361 = vpop.permute.xlu0 %360
        %364 = vset.pattern.permute.xlu0 0
        %365 = vperm.xlu0 %364, %v347
        %v366 = vpop.permute.xlu0 %365
        %vm368 = vcmask 105472
        %v370 = vsel %vm368, %v308, 0
        %v373 = vsel %vm368, %v309, 0
        %v376 = vsel %vm368, %v310, 0
        %v379 = vsel %vm368, %v311, 0
        %v382 = vsel %vm368, %v312, 0
        %v385 = vsel %vm368, %v313, 0
        %v388 = vsel %vm368, %v314, 0
        %v391 = vsel %vm368, %v315, 0
        %v394 = vsel %vm368, %v316, 0
        %v397 = vsel %vm368, %v317, 0
        %v400 = vsel %vm368, %v318, 0
        %v403 = vsel %vm368, %v319, 0
        %v406 = vsel %vm368, %v320, 0
        %v409 = vsel %vm368, %v321, 0
        %v412 = vsel %vm368, %v322, 0
        %v415 = vsel %vm368, %v323, 0
        %v418 = vsel %vm368, %v324, 0
        %v421 = vsel %vm368, %v325, 0
        %v424 = vsel %vm368, %v326, 0
        %v427 = vsel %vm368, %v327, 0
        %v430 = vsel %vm368, %v328, 0
        %v433 = vsel %vm368, %v329, 0
        %v436 = vsel %vm368, %v330, 0
        %v439 = vsel %vm368, %v331, 0
        %v442 = vsel %vm368, %v332, 0
        %v445 = vsel %vm368, %v333, 0
        %v448 = vsel %vm368, %v334, 0
        %v451 = vsel %vm368, %v335, 0
        %v454 = vsel %vm368, %v336, 0
        %v457 = vsel %vm368, %v337, 0
        %v460 = vsel %vm368, %v338, 0
        %v463 = vsel %vm368, %v339, 0
        %v466 = vsel %vm368, %v340, 0
        %v469 = vsel %vm368, %v341, 0
        %v472 = vsel %vm368, %v342, 0
        %v475 = vsel %vm368, %v343, 0
        %477 = vmatprep.subr.mxu0 0.0
        %478 = vmatpush1.xpose.msra.mxu0 %v427
        %479 = vmatprep.subr.mxu0 0.0
        %480 = vmatpush1.xpose.msra.mxu0 %v424
        %481 = vmatprep.subr.mxu0 0.0
        %482 = vmatpush1.xpose.msra.mxu0 %v421
        %483 = vmatprep.subr.mxu0 0.0
        %484 = vmatpush1.xpose.msra.mxu0 %v418
        %485 = vmatprep.subr.mxu0 0.0
        %486 = vmatpush1.xpose.msra.mxu0 %v415
        %487 = vmatprep.subr.mxu0 0.0
        %488 = vmatpush1.xpose.msra.mxu0 %v412
        %489 = vmatprep.subr.mxu0 0.0
        %490 = vmatpush1.xpose.msra.mxu0 %v409
        %491 = vmatprep.subr.mxu0 0.0
        %492 = vmatpush1.xpose.msra.mxu0 %v406
        %493 = vmatprep.subr.mxu0 0.0
        %494 = vmatpush1.xpose.msra.mxu0 %v403
        %495 = vmatprep.subr.mxu0 0.0
        %496 = vmatpush1.xpose.msra.mxu0 %v400
        %497 = vmatprep.subr.mxu0 0.0
        %498 = vmatpush1.xpose.msra.mxu0 %v397
        %499 = vmatprep.subr.mxu0 0.0
        %500 = vmatpush1.xpose.msra.mxu0 %v394
        %501 = vmatprep.subr.mxu0 0.0
        %502 = vmatpush1.xpose.msra.mxu0 %v391
        %503 = vmatprep.subr.mxu0 0.0
        %504 = vmatpush1.xpose.msra.mxu0 %v388
        %505 = vmatprep.subr.mxu0 0.0
        %506 = vmatpush1.xpose.msra.mxu0 %v385
        %507 = vmatprep.subr.mxu0 0.0
        %508 = vmatpush1.xpose.msra.mxu0 %v382
        %509 = vmatprep.subr.mxu0 0.0
        %510 = vmatpush2.xpose.msra.mxu0 %v475
        %511 = vmatprep.subr.mxu0 0.0
        %512 = vmatpush2.xpose.msra.mxu0 %v472
        %513 = vmatprep.subr.mxu0 0.0
        %514 = vmatpush2.xpose.msra.mxu0 %v469
        %515 = vmatprep.subr.mxu0 0.0
        %516 = vmatpush2.xpose.msra.mxu0 %v466
        %517 = vmatprep.subr.mxu0 0.0
        %518 = vmatpush2.xpose.msra.mxu0 %v463
        %519 = vmatprep.subr.mxu0 0.0
        %520 = vmatpush2.xpose.msra.mxu0 %v460
        %521 = vmatprep.subr.mxu0 0.0
        %522 = vmatpush2.xpose.msra.mxu0 %v457
        %523 = vmatprep.subr.mxu0 0.0
        %524 = vmatpush2.xpose.msra.mxu0 %v454
        %525 = vmatprep.subr.mxu0 0.0
        %526 = vmatpush2.xpose.msra.mxu0 %v451
        %527 = vmatprep.subr.mxu0 0.0
        %528 = vmatpush2.xpose.msra.mxu0 %v448
        %529 = vmatprep.subr.mxu0 0.0
        %530 = vmatpush2.xpose.msra.mxu0 %v445
        %531 = vmatprep.subr.mxu0 0.0
        %532 = vmatpush2.xpose.msra.mxu0 %v442
        %533 = vmatprep.subr.mxu0 0.0
        %534 = vmatpush2.xpose.msra.mxu0 %v439
        %535 = vmatprep.subr.mxu0 0.0
        %536 = vmatpush2.xpose.msra.mxu0 %v436
        %537 = vmatprep.subr.mxu0 0.0
        %538 = vmatpush2.xpose.msra.mxu0 %v433
        %539 = vmatprep.subr.mxu0 0.0
        %540 = vmatpush2.xpose.msra.mxu0 %v430
        %541 = vmatprep.mubr.f32.mxu0 0.0
        %542 = vmatmul.mubr.f32.gmra.mxu0 %v370
        %v543 = vpop.f32.mrf.mxu0
        %v544 = vadd.f32 %v351, %v543
        %v545 = vpop.f32.mrf.mxu0
        %v546 = vadd.f32 %v351, %v545
        %547 = vmatprep.mubr.f32.mxu0 0.0
        %548 = vmatmul.mubr.f32.gmra.mxu0 %v373
        %v549 = vpop.f32.mrf.mxu0
        %v550 = vadd.f32 %v356, %v549
        %v551 = vpop.f32.mrf.mxu0
        %v552 = vadd.f32 %v356, %v551
        %553 = vmatprep.mubr.f32.mxu0 0.0
        %554 = vmatmul.mubr.f32.gmra.mxu0 %v376
        %v555 = vpop.f32.mrf.mxu0
        %v556 = vadd.f32 %v361, %v555
        %v557 = vpop.f32.mrf.mxu0
        %v558 = vadd.f32 %v361, %v557
        %559 = vmatprep.mubr.f32.mxu0 0.0
        %560 = vmatmul.mubr.f32.gmra.mxu0 %v379
        %v561 = vpop.f32.mrf.mxu0
        %v562 = vadd.f32 %v366, %v561
        %v563 = vpop.f32.mrf.mxu0
        %v564 = vadd.f32 %v366, %v563
        %565 = vdwg.mxu0
        %v566 = vmax.f32 %v544, 0.0
        %v567 = vmax.f32 %v546, 0.0
        %v568 = vmax.f32 %v550, 0.0
        %v569 = vmax.f32 %v552, 0.0
        %v570 = vmax.f32 %v556, 0.0
        %v571 = vmax.f32 %v558, 0.0
        %v572 = vmax.f32 %v562, 0.0
        %v573 = vmax.f32 %v564, 0.0
        %v574 = vld [vmem:[%s4] sm:$0xff]
        %v575 = vld [vmem:[%s4 + $0x8] sm:$0xff]
        %v576 = vld [vmem:[%s4 + $0x10] sm:$0xff]
        %v577 = vld [vmem:[%s4 + $0x18] sm:$0xff]
        %v578 = vld [vmem:[%s4 + $0x20] sm:$0xff]
        %v579 = vld [vmem:[%s4 + $0x28] sm:$0xff]
        %v580 = vld [vmem:[%s4 + $0x30] sm:$0xff]
        %v581 = vld [vmem:[%s4 + $0x38] sm:$0xff]
        %v582 = vld [vmem:[%s5] sm:$0xff]
        %v583 = vld [vmem:[%s5 + $0x8] sm:$0xff]
        %v584 = vld [vmem:[%s5 + $0x10] sm:$0xff]
        %v585 = vld [vmem:[%s5 + $0x18] sm:$0xff]
        %v586 = vld [vmem:[%s5 + $0x20] sm:$0xff]
        %v587 = vld [vmem:[%s5 + $0x28] sm:$0xff]
        %v588 = vld [vmem:[%s5 + $0x30] sm:$0xff]
        %v589 = vld [vmem:[%s5 + $0x38] sm:$0xff]
        %591 = vset.pattern.permute.xlu0 0
        %592 = vperm.xlu0 %591, %v582
        %v593 = vpop.permute.xlu0 %592
        %596 = vset.pattern.permute.xlu0 0
        %597 = vperm.xlu0 %596, %v583
        %v598 = vpop.permute.xlu0 %597
        %601 = vset.pattern.permute.xlu0 0
        %602 = vperm.xlu0 %601, %v584
        %v603 = vpop.permute.xlu0 %602
        %606 = vset.pattern.permute.xlu0 0
        %607 = vperm.xlu0 %606, %v585
        %v608 = vpop.permute.xlu0 %607
        %611 = vset.pattern.permute.xlu0 0
        %612 = vperm.xlu0 %611, %v586
        %v613 = vpop.permute.xlu0 %612
        %616 = vset.pattern.permute.xlu0 0
        %617 = vperm.xlu0 %616, %v587
        %v618 = vpop.permute.xlu0 %617
        %621 = vset.pattern.permute.xlu0 0
        %622 = vperm.xlu0 %621, %v588
        %v623 = vpop.permute.xlu0 %622
        %626 = vset.pattern.permute.xlu0 0
        %627 = vperm.xlu0 %626, %v589
        %v628 = vpop.permute.xlu0 %627
        %vm630 = vcmask 261120
        %v632 = vsel %vm630, %v574, 0
        %v635 = vsel %vm630, %v575, 0
        %v638 = vsel %vm630, %v576, 0
        %v641 = vsel %vm630, %v577, 0
        %v644 = vsel %vm630, %v578, 0
        %v647 = vsel %vm630, %v579, 0
        %v650 = vsel %vm630, %v580, 0
        %v653 = vsel %vm630, %v581, 0
        %655 = vmatprep.subr.mxu0 0.0
        %656 = vmatpush1.msra.mxu0 0.0
        %657 = vmatprep.subr.mxu0 0.0
        %658 = vmatpush1.msra.mxu0 0.0
        %659 = vmatprep.subr.mxu0 0.0
        %660 = vmatpush1.msra.mxu0 0.0
        %661 = vmatprep.subr.mxu0 0.0
        %662 = vmatpush1.msra.mxu0 0.0
        %663 = vmatprep.subr.mxu0 0.0
        %664 = vmatpush1.msra.mxu0 0.0
        %665 = vmatprep.subr.mxu0 0.0
        %666 = vmatpush1.msra.mxu0 0.0
        %667 = vmatprep.subr.mxu0 0.0
        %668 = vmatpush1.msra.mxu0 0.0
        %669 = vmatprep.subr.mxu0 0.0
        %670 = vmatpush1.msra.mxu0 0.0
        %671 = vmatprep.subr.mxu0 0.0
        %672 = vmatpush1.msra.mxu0 0.0
        %673 = vmatprep.subr.mxu0 0.0
        %674 = vmatpush1.msra.mxu0 0.0
        %675 = vmatprep.subr.mxu0 0.0
        %676 = vmatpush1.msra.mxu0 0.0
        %677 = vmatprep.subr.mxu0 0.0
        %678 = vmatpush1.msra.mxu0 0.0
        %679 = vmatprep.subr.mxu0 %v573
        %680 = vmatpush1.msra.mxu0 %v572
        %681 = vmatprep.subr.mxu0 %v571
        %682 = vmatpush1.msra.mxu0 %v570
        %683 = vmatprep.subr.mxu0 %v569
        %684 = vmatpush1.msra.mxu0 %v568
        %685 = vmatprep.subr.mxu0 %v567
        %686 = vmatpush1.msra.mxu0 %v566
        %687 = vmatprep.subr.mxu0 0.0
        %688 = vmatpush2.msra.mxu0 0.0
        %689 = vmatprep.subr.mxu0 0.0
        %690 = vmatpush2.msra.mxu0 0.0
        %691 = vmatprep.subr.mxu0 0.0
        %692 = vmatpush2.msra.mxu0 0.0
        %693 = vmatprep.subr.mxu0 0.0
        %694 = vmatpush2.msra.mxu0 0.0
        %695 = vmatprep.subr.mxu0 0.0
        %696 = vmatpush2.msra.mxu0 0.0
        %697 = vmatprep.subr.mxu0 0.0
        %698 = vmatpush2.msra.mxu0 0.0
        %699 = vmatprep.subr.mxu0 0.0
        %700 = vmatpush2.msra.mxu0 0.0
        %701 = vmatprep.subr.mxu0 0.0
        %702 = vmatpush2.msra.mxu0 0.0
        %703 = vmatprep.subr.mxu0 0.0
        %704 = vmatpush2.msra.mxu0 0.0
        %705 = vmatprep.subr.mxu0 0.0
        %706 = vmatpush2.msra.mxu0 0.0
        %707 = vmatprep.subr.mxu0 0.0
        %708 = vmatpush2.msra.mxu0 0.0
        %709 = vmatprep.subr.mxu0 0.0
        %710 = vmatpush2.msra.mxu0 0.0
        %711 = vmatprep.subr.mxu0 0.0
        %712 = vmatpush2.msra.mxu0 0.0
        %713 = vmatprep.subr.mxu0 0.0
        %714 = vmatpush2.msra.mxu0 0.0
        %715 = vmatprep.subr.mxu0 0.0
        %716 = vmatpush2.msra.mxu0 0.0
        %717 = vmatprep.subr.mxu0 0.0
        %718 = vmatpush2.msra.mxu0 0.0
        %719 = vmatprep.mubr.f32.mxu0 0.0
        %720 = vmatmul.mubr.f32.gmra.mxu0 %v632
        %v721 = vpop.f32.mrf.mxu0
        %v722 = vadd.f32 %v593, %v721
        %v723 = vpop.f32.mrf.mxu0
        %v724 = vadd.f32 %v593, %v723
        %725 = vmatprep.mubr.f32.mxu0 0.0
        %726 = vmatmul.mubr.f32.gmra.mxu0 %v635
        %v727 = vpop.f32.mrf.mxu0
        %v728 = vadd.f32 %v598, %v727
        %v729 = vpop.f32.mrf.mxu0
        %v730 = vadd.f32 %v598, %v729
        %731 = vmatprep.mubr.f32.mxu0 0.0
        %732 = vmatmul.mubr.f32.gmra.mxu0 %v638
        %v733 = vpop.f32.mrf.mxu0
        %v734 = vadd.f32 %v603, %v733
        %v735 = vpop.f32.mrf.mxu0
        %v736 = vadd.f32 %v603, %v735
        %737 = vmatprep.mubr.f32.mxu0 0.0
        %738 = vmatmul.mubr.f32.gmra.mxu0 %v641
        %v739 = vpop.f32.mrf.mxu0
        %v740 = vadd.f32 %v608, %v739
        %v741 = vpop.f32.mrf.mxu0
        %v742 = vadd.f32 %v608, %v741
        %743 = vmatprep.mubr.f32.mxu0 0.0
        %744 = vmatmul.mubr.f32.gmra.mxu0 %v644
        %v745 = vpop.f32.mrf.mxu0
        %v746 = vadd.f32 %v613, %v745
        %v747 = vpop.f32.mrf.mxu0
        %v748 = vadd.f32 %v613, %v747
        %749 = vmatprep.mubr.f32.mxu0 0.0
        %750 = vmatmul.mubr.f32.gmra.mxu0 %v647
        %v751 = vpop.f32.mrf.mxu0
        %v752 = vadd.f32 %v618, %v751
        %v753 = vpop.f32.mrf.mxu0
        %v754 = vadd.f32 %v618, %v753
        %755 = vmatprep.mubr.f32.mxu0 0.0
        %756 = vmatmul.mubr.f32.gmra.mxu0 %v650
        %v757 = vpop.f32.mrf.mxu0
        %v758 = vadd.f32 %v623, %v757
        %v759 = vpop.f32.mrf.mxu0
        %v760 = vadd.f32 %v623, %v759
        %761 = vmatprep.mubr.f32.mxu0 0.0
        %762 = vmatmul.mubr.f32.gmra.mxu0 %v653
        %v763 = vpop.f32.mrf.mxu0
        %v764 = vadd.f32 %v628, %v763
        %v765 = vpop.f32.mrf.mxu0
        %v766 = vadd.f32 %v628, %v765
        %767 = vdwg.mxu0
        %v768 = vmax.f32 %v722, 0.0
        %v769 = vmax.f32 %v724, 0.0
        %v770 = vmax.f32 %v728, 0.0
        %v771 = vmax.f32 %v730, 0.0
        %v772 = vmax.f32 %v734, 0.0
        %v773 = vmax.f32 %v736, 0.0
        %v774 = vmax.f32 %v740, 0.0
        %v775 = vmax.f32 %v742, 0.0
        %v776 = vmax.f32 %v746, 0.0
        %v777 = vmax.f32 %v748, 0.0
        %v778 = vmax.f32 %v752, 0.0
        %v779 = vmax.f32 %v754, 0.0
        %v780 = vmax.f32 %v758, 0.0
        %v781 = vmax.f32 %v760, 0.0
        %v782 = vmax.f32 %v764, 0.0
        %v783 = vmax.f32 %v766, 0.0
        %v784 = vld [vmem:[%s6] sm:$0x1]
        %v785 = vld [vmem:[#allocation4] sm:$0x1]
        %787 = vset.pattern.permute.xlu0 0
        %788 = vperm.xlu0 %787, %v785
        %v789 = vpop.permute.xlu0 %788
        %v791 = vlaneseq
        %v792 = vshrl.u32 %v791, 7
        %v793 = vsub.s32 0, %v792
        %v794 = vrot.slane %v789, %v793
        %vm795 = vcmask 523264
        %v797 = vsel %vm795, %v784, 0
        %799 = vmatprep.subr.mxu0 0.0
        %800 = vmatpush1.msra.mxu0 0.0
        %801 = vmatprep.subr.mxu0 0.0
        %802 = vmatpush1.msra.mxu0 0.0
        %803 = vmatprep.subr.mxu0 0.0
        %804 = vmatpush1.msra.mxu0 0.0
        %805 = vmatprep.subr.mxu0 0.0
        %806 = vmatpush1.msra.mxu0 0.0
        %807 = vmatprep.subr.mxu0 0.0
        %808 = vmatpush1.msra.mxu0 0.0
        %809 = vmatprep.subr.mxu0 0.0
        %810 = vmatpush1.msra.mxu0 0.0
        %811 = vmatprep.subr.mxu0 0.0
        %812 = vmatpush1.msra.mxu0 0.0
        %813 = vmatprep.subr.mxu0 0.0
        %814 = vmatpush1.msra.mxu0 0.0
        %815 = vmatprep.subr.mxu0 %v783
        %816 = vmatpush1.msra.mxu0 %v782
        %817 = vmatprep.subr.mxu0 %v781
        %818 = vmatpush1.msra.mxu0 %v780
        %819 = vmatprep.subr.mxu0 %v779
        %820 = vmatpush1.msra.mxu0 %v778
        %821 = vmatprep.subr.mxu0 %v777
        %822 = vmatpush1.msra.mxu0 %v776
        %823 = vmatprep.subr.mxu0 %v775
        %824 = vmatpush1.msra.mxu0 %v774
        %825 = vmatprep.subr.mxu0 %v773
        %826 = vmatpush1.msra.mxu0 %v772
        %827 = vmatprep.subr.mxu0 %v771
        %828 = vmatpush1.msra.mxu0 %v770
        %829 = vmatprep.subr.mxu0 %v769
        %830 = vmatpush1.msra.mxu0 %v768
        %831 = vmatprep.subr.mxu0 0.0
        %832 = vmatpush2.msra.mxu0 0.0
        %833 = vmatprep.subr.mxu0 0.0
        %834 = vmatpush2.msra.mxu0 0.0
        %835 = vmatprep.subr.mxu0 0.0
        %836 = vmatpush2.msra.mxu0 0.0
        %837 = vmatprep.subr.mxu0 0.0
        %838 = vmatpush2.msra.mxu0 0.0
        %839 = vmatprep.subr.mxu0 0.0
        %840 = vmatpush2.msra.mxu0 0.0
        %841 = vmatprep.subr.mxu0 0.0
        %842 = vmatpush2.msra.mxu0 0.0
        %843 = vmatprep.subr.mxu0 0.0
        %844 = vmatpush2.msra.mxu0 0.0
        %845 = vmatprep.subr.mxu0 0.0
        %846 = vmatpush2.msra.mxu0 0.0
        %847 = vmatprep.subr.mxu0 0.0
        %848 = vmatpush2.msra.mxu0 0.0
        %849 = vmatprep.subr.mxu0 0.0
        %850 = vmatpush2.msra.mxu0 0.0
        %851 = vmatprep.subr.mxu0 0.0
        %852 = vmatpush2.msra.mxu0 0.0
        %853 = vmatprep.subr.mxu0 0.0
        %854 = vmatpush2.msra.mxu0 0.0
        %855 = vmatprep.subr.mxu0 0.0
        %856 = vmatpush2.msra.mxu0 0.0
        %857 = vmatprep.subr.mxu0 0.0
        %858 = vmatpush2.msra.mxu0 0.0
        %859 = vmatprep.subr.mxu0 0.0
        %860 = vmatpush2.msra.mxu0 0.0
        %861 = vmatprep.subr.mxu0 0.0
        %862 = vmatpush2.msra.mxu0 0.0
        %863 = vmatprep.mubr.f32.mxu0 0.0
        %864 = vmatmul.mubr.f32.gmra.mxu0 %v797
        %v865 = vpop.f32.mrf.mxu0
        %v866 = vadd.f32 %v794, %v865
        %v867 = vpop.f32.mrf.mxu0
        %v868 = vadd.f32 %v794, %v867
        %869 = vdwg.mxu0
        %v872 = vcombine.low %v866, %v868
        %v874 = vunpack.c.l.s4 1966171168
        %v875 = vunpack.c.0.s8 %v874
        %v876 = vlaneseq
        %v877 = vshrl.u32 %v876, 7
        %v878 = vsub.s32 %v875, %v877
        %v879 = vrot.slane %v872, %v878
        %v881 = vunpack.c.l.s4 1966171168
        %v882 = vunpack.c.0.s8 %v881
        %v883 = vlaneseq
        %v884 = vshrl.u32 %v883, 7
        %v885 = vsub.s32 %v882, %v884
        %v886 = vrot.slane %v879, %v885
        %v888 = vlaneseq
        %vm889 = vcmp.ge.s32.totalorder %v888, 0
        %vm890 = vcmp.lt.s32.totalorder %v888, 256
        %vm891 = vmand %vm889, %vm890
        %892 = vst.msk [vmem:[%s288] sm:$0x3] %vm891, %v886
        %s893 = sand.u32 %s185, 1
        %s894 = scalar_lea.sflag [#allocation6], %s893
        %s895 = sand.u32 %s185, 1
        %s896 = smul.addr %s895, 2
        %s897 = scalar_lea.vmem [#allocation5], %s896
        // Predicated region
        $region49: #{model_maker_forward.1} parent=47 // pred_check
          %p898 = pneg %p195
        $region50: #{model_maker_forward.1} parent=47 // pred_check_branch
          %900 = sbr.rel (%p898) target = $region52
        $region51: #{model_maker_forward.1} parent=47 // pred_region
          %s901 = smul.u32 2, %s25
          %s902 = ssub.s32 3, %s901
          %p903 = scmp.lt.s32.totalorder %s902, 2
          %s904 = scalar_select %p903, %s902, 2
          %s905 = smul.u32 16, %s904
          %s907 = ssub.s32 32, %s905
          %908 = vsyncadd %s894, %s907
          %p909 = scmp.ne.s32.totalorder 0, %s905
          %s910 = smul.addr %s901, 16
          %s911 = scalar_lea.hbm %s8, %s910
          %s912 = sshll.u32 %s904, 4
          %s913 = sshll.u32 %s897, 4
          %s914 = int_to_ptr.vmem [resolvable:$true] %s913
          %916 = dma.vmem_to_hbm [thread:$0]  (%p909), %s914, %s912, %s911, %s894
        $region52: #{model_maker_forward.1} parent=47 // pred_fallthru
          _
      $region48: #{model_maker_forward.1} parent=5 // pred_fallthru
        _
      %p917 = scmp.le.s32.totalorder 2, %s20
      // Predicated region
      $region53: #{model_maker_forward.1} parent=5 // pred_check
        %p918 = pneg %p917
      $region54: #{model_maker_forward.1} parent=5 // pred_check_branch
        %920 = sbr.rel (%p918) target = $region56
      $region55: #{model_maker_forward.1} parent=5 // pred_region
        %s921 = ssub.s32 %s20, 2
        // Predicated region
        $region57: #{model_maker_forward.1} parent=55 // pred_check
          %p922 = pneg %p201
        $region58: #{model_maker_forward.1} parent=55 // pred_check_branch
          %924 = sbr.rel (%p922) target = $region60
        $region59: #{model_maker_forward.1} parent=55 // pred_region
          %s925 = sand.u32 %s186, 1
          %s926 = scalar_lea.sflag [#allocation6], %s925
          %s927 = sand.u32 %s186, 1
          %s928 = smul.addr %s927, 2
          %s929 = scalar_lea.vmem [#allocation5], %s928
          %930 = dma.done %s926, 32
        $region60: #{model_maker_forward.1} parent=55 // pred_fallthru
          _
      $region56: #{model_maker_forward.1} parent=5 // pred_fallthru
        _
    $region6: #{model_maker_forward.1} parent=1 // loop_footer
      %s24 = sadd.s32 1, %s20
    $region7: #{model_maker_forward.1} parent=1 // loop_footer_branch
      %19 = sbr.rel target = $region3
    $region8: #{model_maker_forward.1} parent=1 // loop_exit
      _
    %931 = vsyncpa [#allocation6], 1
    %s932 = scalar_lea.sflag [#allocation6], 1
    %933 = vsyncpa %s932, 1

</llo_original>
